<compile_context>
chip_gen: v5e
topology: v5e:2x2
jax: 0.10.0
libtpu: 0.0.40
codegen_flags: <defaults>
</compile_context>

<pallas_src>
import functools
import math

import jax
import jax.numpy as jnp
from jax import lax
from jax.experimental import pallas as pl
from jax.experimental.pallas import tpu as pltpu


def _spatial_attention_kernel(cm_ref, x_ref, out_ref, attn_ref):
    """One grid step: a block of Nb images, spatially flattened (lane-dense).

    cm_ref:   (2, HW, HW) f32  conv-as-matmul (Toeplitz) matrices for the
                               max-pooled / avg-pooled channels.
    x_ref:    (Nb, C, HW)      unpadded input block
    out_ref:  (Nb, C, HW)      gated output
    attn_ref: (Nb, 1, HW)      attention map
    """
    x = x_ref[...].astype(jnp.float32)                      # (Nb, C, HW)

    # Channel-wise max / mean pooling (cheap sublane reduction; C is small).
    x_max = jnp.max(x, axis=1)                               # (Nb, HW)
    x_avg = jnp.mean(x, axis=1)                              # (Nb, HW)

    # 7x7 'same' conv (2 -> 1 channels, no bias) as two MXU matmuls against
    # precomputed Toeplitz matrices; zero-padding at the image border is
    # encoded as zero matrix entries, so no halo handling is needed here.
    pre = (jnp.dot(x_max, cm_ref[0], preferred_element_type=jnp.float32) +
           jnp.dot(x_avg, cm_ref[1], preferred_element_type=jnp.float32))

    attn = jax.nn.sigmoid(pre)                               # (Nb, HW)

    # Lane-dense stores; gate reads x directly (no re-slice copy).
    attn_ref[...] = attn[:, None, :].astype(attn_ref.dtype)
    out_ref[...] = (x * attn[:, None, :]).astype(out_ref.dtype)


def _conv_toeplitz(conv_w, H, W, K):
    """(2, H*W, H*W) f32 matrices M_c with
         pre[n, dst] = sum_c  pooled[n, c, :] @ M_c[:, dst]
       equal to a 2->1 channel KxK 'same' convolution with zero padding."""
    p = K // 2
    HW = H * W
    dst = jnp.arange(HW)
    dh = dst // W
    dw = dst % W
    mats = []
    for c in range(2):
        m = jnp.zeros((HW, HW), jnp.float32)
        for kh in range(K):
            for kw in range(K):
                sh = dh + (kh - p)
                sw = dw + (kw - p)
                valid = (sh >= 0) & (sh < H) & (sw >= 0) & (sw < W)
                src = jnp.where(valid, sh * W + sw, 0)
                w = conv_w[0, c, kh, kw].astype(jnp.float32)
                m = m.at[src, dst].add(jnp.where(valid, w, 0.0))
        mats.append(m)
    return jnp.stack(mats, axis=0)                            # (2, HW, HW)


def _pick_batch_block(N, bytes_per_image, vmem_budget_bytes=2 * 1024 * 1024):
    """Largest divisor of N whose input block fits the budget, preferring to
    keep at least two grid steps so the batch axis can shard across cores."""
    divisors = [d for d in range(1, N + 1) if N % d == 0]
    fitting = [d for d in divisors if d * bytes_per_image <= vmem_budget_bytes]
    if not fitting:
        fitting = [1]
    multi_step = [d for d in fitting if N // d >= 2]
    return max(multi_step) if multi_step else max(fitting)


def spatial_attention_forward(x, conv_w, kernel_size=7):
    """x: (N, C, H, W); conv_w: (1, 2, K, K) f32. Returns (outputs, attn)."""
    N, C, H, W = x.shape
    K = kernel_size
    HW = H * W

    itemsize = x.dtype.itemsize
    Nb = _pick_batch_block(N, C * HW * itemsize)
    grid = (N // Nb,)

    # Free relayout (contiguous): present the big tensors lane-dense as (N,C,HW).
    x_flat = x.reshape(N, C, HW)
    cm = _conv_toeplitz(conv_w, H, W, K)                      # (2, HW, HW) f32

    # Explicit scoped-VMEM budget: conv matrices + double-buffered in/out
    # blocks + attention block + in-kernel f32 temporaries, with headroom;
    # capped at the 32 MiB scoped default (safe on v5e/v6e/v7x).
    cm_bytes = 2 * HW * HW * 4
    blk_bytes = Nb * C * HW * itemsize
    attn_bytes = Nb * HW * itemsize
    tmp_bytes = Nb * (C + 4) * HW * 4
    vmem_limit = int(min(32 * 1024 * 1024,
                         max(16 * 1024 * 1024,
                             2 * cm_bytes + 4 * blk_bytes + 2 * attn_bytes
                             + 2 * tmp_bytes + (2 << 20))))

    out_flat, attn_flat = pl.pallas_call(
        _spatial_attention_kernel,
        out_shape=(
            jax.ShapeDtypeStruct((N, C, HW), x.dtype),
            jax.ShapeDtypeStruct((N, 1, HW), x.dtype),
        ),
        grid=grid,
        in_specs=[
            # conv matrices: constant block index -> re-DMA elided per step
            pl.BlockSpec((2, HW, HW), lambda n: (0, 0, 0)),
            # Nb unpadded images per grid step, lane-dense last dim
            pl.BlockSpec((Nb, C, HW), lambda n: (n, 0, 0)),
        ],
        out_specs=(
            pl.BlockSpec((Nb, C, HW), lambda n: (n, 0, 0)),
            pl.BlockSpec((Nb, 1, HW), lambda n: (n, 0, 0)),
        ),
        compiler_params=pltpu.CompilerParams(
            dimension_semantics=("parallel",),
            vmem_limit_bytes=vmem_limit),
    )(cm, x_flat)

    return out_flat.reshape(N, C, H, W), attn_flat.reshape(N, 1, H, W)


def spatial_attention_ref(x, conv_w, kernel_size=7):
    """Pure-JAX reference matching the PyTorch forward pass."""
    p = kernel_size // 2
    x_max = jnp.max(x, axis=1, keepdims=True)
    x_avg = jnp.mean(x, axis=1, keepdims=True)
    m = jnp.concatenate([x_max, x_avg], axis=1)                # (N, 2, H, W)
    conv = lax.conv_general_dilated(
        m, conv_w, window_strides=(1, 1), padding=[(p, p), (p, p)],
        dimension_numbers=("NCHW", "OIHW", "NCHW"))
    attn = jax.nn.sigmoid(conv)
    return x * attn, attn


if __name__ == "__main__":
    key = jax.random.PRNGKey(0)
    kx, kw = jax.random.split(key)

    N, C, H, W = 2, 4, 16, 16
    K = 7
    x = jax.random.normal(kx, (N, C, H, W), dtype=jnp.float32)

    # Deterministic Conv2d weight init (PyTorch default: kaiming_uniform with
    # a=sqrt(5) -> bound = 1/sqrt(fan_in), fan_in = 2*K*K); no bias.
    fan_in = 2 * K * K
    bound = 1.0 / math.sqrt(fan_in)
    conv_w = jax.random.uniform(kw, (1, 2, K, K), minval=-bound, maxval=bound,
                                dtype=jnp.float32)

    out, attn = spatial_attention_forward(x, conv_w, K)
    out = jax.block_until_ready(out)
    attn = jax.block_until_ready(attn)

    out_expected, attn_expected = spatial_attention_ref(x, conv_w, K)
    assert out.shape == (N, C, H, W) and attn.shape == (N, 1, H, W)
    assert jnp.allclose(out, out_expected, atol=1e-5, rtol=1e-5)
    assert jnp.allclose(attn, attn_expected, atol=1e-5, rtol=1e-5)

    print("KERNEL_OK")
</pallas_src>

<mosaic_0001>
module attributes {stable_mosaic.version = 11 : i64} {
  func.func @_spatial_attention_kernel(%arg0: i32, %arg1: memref<2x256x256xf32, #tpu.memory_space<vmem>>, %arg2: memref<1x4x256xf32, #tpu.memory_space<vmem>>, %arg3: memref<1x4x256xf32, #tpu.memory_space<vmem>>, %arg4: memref<1x1x256xf32, #tpu.memory_space<vmem>>) attributes {dimension_semantics = [#tpu.dimension_semantics<parallel>], iteration_bounds = array<i64: 2>, scalar_prefetch = 0 : i64, scratch_operands = 0 : i64, tpu.core_type = #tpu.core_type<tc>, window_params = [{pipeline_mode = #tpu.pipeline_mode<synchronous>, transform_indices = @transform_0, window_bounds = array<i64: 2, 256, 256>}, {transform_indices = @transform_1, window_bounds = array<i64: 1, 4, 256>}, {transform_indices = @transform_2, window_bounds = array<i64: 1, 4, 256>}, {transform_indices = @transform_3, window_bounds = array<i64: 1, 1, 256>}]} {
    %c0 = arith.constant 0 : index
    %c0_0 = arith.constant 0 : index
    %c0_1 = arith.constant 0 : index
    %0 = vector.load %arg2[%c0, %c0_0, %c0_1] : memref<1x4x256xf32, #tpu.memory_space<vmem>>, vector<1x4x256xf32>
    %cst = arith.constant dense<0xFF800000> : vector<1x256xf32>
    %1 = vector.multi_reduction <maximumf>, %0, %cst [1] : vector<1x4x256xf32> to vector<1x256xf32>
    %cst_2 = arith.constant dense<0.000000e+00> : vector<1x256xf32>
    %2 = vector.multi_reduction <add>, %0, %cst_2 [1] : vector<1x4x256xf32> to vector<1x256xf32>
    %cst_3 = arith.constant 4.000000e+00 : f32
    %3 = vector.broadcast %cst_3 : f32 to vector<1x256xf32>
    %4 = arith.divf %2, %3 : vector<1x256xf32>
    %c0_4 = arith.constant 0 : index
    %c0_5 = arith.constant 0 : index
    %c0_6 = arith.constant 0 : index
    %5 = vector.load %arg1[%c0_4, %c0_5, %c0_6] : memref<2x256x256xf32, #tpu.memory_space<vmem>>, vector<1x256x256xf32>
    %6 = vector.shape_cast %5 : vector<1x256x256xf32> to vector<256x256xf32>
    %cst_7 = arith.constant dense<0.000000e+00> : vector<1x256xf32>
    %7 = tpu.matmul %1, %6, %cst_7 {dimension_numbers = #tpu.dot_dimension_numbers<[1], [0], [0], [1], [0, 0, 1, 1], [], []>} : vector<1x256xf32>, vector<256x256xf32>, vector<1x256xf32> -> vector<1x256xf32>
    %c1 = arith.constant 1 : index
    %c0_8 = arith.constant 0 : index
    %c0_9 = arith.constant 0 : index
    %8 = vector.load %arg1[%c1, %c0_8, %c0_9] : memref<2x256x256xf32, #tpu.memory_space<vmem>>, vector<1x256x256xf32>
    %9 = vector.shape_cast %8 : vector<1x256x256xf32> to vector<256x256xf32>
    %cst_10 = arith.constant dense<0.000000e+00> : vector<1x256xf32>
    %10 = tpu.matmul %4, %9, %cst_10 {dimension_numbers = #tpu.dot_dimension_numbers<[1], [0], [0], [1], [0, 0, 1, 1], [], []>} : vector<1x256xf32>, vector<256x256xf32>, vector<1x256xf32> -> vector<1x256xf32>
    %11 = arith.addf %7, %10 : vector<1x256xf32>
    %12 = arith.negf %11 : vector<1x256xf32>
    %13 = math.exp %12 : vector<1x256xf32>
    %cst_11 = arith.constant 1.000000e+00 : f32
    %14 = vector.broadcast %cst_11 : f32 to vector<1x256xf32>
    %15 = arith.addf %14, %13 : vector<1x256xf32>
    %16 = arith.divf %14, %15 : vector<1x256xf32>
    %17 = vector.shape_cast %16 : vector<1x256xf32> to vector<1x1x256xf32>
    %c0_12 = arith.constant 0 : index
    %c0_13 = arith.constant 0 : index
    %c0_14 = arith.constant 0 : index
    %18 = vector.load %arg4[%c0_12, %c0_13, %c0_14] : memref<1x1x256xf32, #tpu.memory_space<vmem>>, vector<1x1x256xf32>
    tpu.vector_store %arg4[%c0_12, %c0_13, %c0_14], %17 {strides = array<i32>} : memref<1x1x256xf32, #tpu.memory_space<vmem>>, vector<1x1x256xf32>,
    %19 = vector.shape_cast %16 : vector<1x256xf32> to vector<1x1x256xf32>
    %20 = vector.broadcast %19 : vector<1x1x256xf32> to vector<1x4x256xf32>
    %21 = arith.mulf %0, %20 : vector<1x4x256xf32>
    %c0_15 = arith.constant 0 : index
    %c0_16 = arith.constant 0 : index
    %c0_17 = arith.constant 0 : index
    %22 = vector.load %arg3[%c0_15, %c0_16, %c0_17] : memref<1x4x256xf32, #tpu.memory_space<vmem>>, vector<1x4x256xf32>
    tpu.vector_store %arg3[%c0_15, %c0_16, %c0_17], %21 {strides = array<i32>} : memref<1x4x256xf32, #tpu.memory_space<vmem>>, vector<1x4x256xf32>,
    return
  }
  func.func @transform_0(%arg0: i32) -> (i32, i32, i32) {
    %c0_i32 = arith.constant 0 : i32
    %c0_i32_0 = arith.constant 0 : i32
    %c0_i32_1 = arith.constant 0 : i32
    %c0_i32_2 = arith.constant 0 : i32
    return %c0_i32, %c0_i32_0, %c0_i32_1 : i32, i32, i32
  }
  func.func @transform_1(%arg0: i32) -> (i32, i32, i32) {
    %c0_i32 = arith.constant 0 : i32
    %c0_i32_0 = arith.constant 0 : i32
    %c0_i32_1 = arith.constant 0 : i32
    return %arg0, %c0_i32, %c0_i32_0 : i32, i32, i32
  }
  func.func @transform_2(%arg0: i32) -> (i32, i32, i32) {
    %c0_i32 = arith.constant 0 : i32
    %c0_i32_0 = arith.constant 0 : i32
    %c0_i32_1 = arith.constant 0 : i32
    return %arg0, %c0_i32, %c0_i32_0 : i32, i32, i32
  }
  func.func @transform_3(%arg0: i32) -> (i32, i32, i32) {
    %c0_i32 = arith.constant 0 : i32
    %c0_i32_0 = arith.constant 0 : i32
    %c0_i32_1 = arith.constant 0 : i32
    return %arg0, %c0_i32, %c0_i32_0 : i32, i32, i32
  }
}

</mosaic_0001>

<llo_original>
// kernel: tpu_custom_call.1
$region0: #{tpu_custom_call.1}
  #allocation0 [shape = 'u32[]', space=smem, size = 0x4, offset = 0x4, fixed_abs, tag = 'smem constant byte address 0x4 - core index']
  #allocation1 [shape = 'u32[72,128]{1,0:T(1,128)}', space=vmem, size = 0x9000, scoped, tag = 'internal scratch']
  %s0 = inlined_call_operand.hbm [shape: f32[2,256,256], index: 0, kind: input, shape index: {}]
  %s1 = inlined_call_operand.hbm [shape: f32[2,4,256], index: 1, kind: input, shape index: {}]
  %s2 = inlined_call_operand.hbm [shape: f32[2,4,256], index: 2, kind: output, shape index: {0}]
  %s3 = inlined_call_operand.hbm [shape: f32[2,1,256], index: 3, kind: output, shape index: {1}]
  %4 = xla_tuple %s2, %s3
  %s5 = sld [smem:[#allocation0]]
  $region57: #{tpu_custom_call.1} parent=0
    _
  %s7 = ssub.s32 1, %s5
  %s8 = scalar_select 0, %s7, %s5
  $region1: #{tpu_custom_call.1} parent=0
    #allocation2 [shape = 'u8[524288]{0}', space=vmem, size = 0x80000, scoped, tag = 'input window, operand 0, single buffered']
    #allocation3 [shape = 's32[2]{0}', space=sflag, size = 0x8, scoped, tag = 'scoped memory for tpu_custom_call.1']
    #allocation4 [shape = 's32[2]{0}', space=sflag, size = 0x8, scoped, tag = 'scoped memory for tpu_custom_call.1']
    #allocation5 [shape = 'u8[8192]{0}', space=vmem, size = 0x2000, scoped, tag = 'input window, operand 1']
    #allocation6 [shape = 's32[2]{0}', space=sflag, size = 0x8, scoped, tag = 'scoped memory for tpu_custom_call.1']
    #allocation7 [shape = 'u8[8192]{0}', space=vmem, size = 0x2000, scoped, tag = 'output window, operand 0']
    #allocation8 [shape = 'u8[2048]{0}', space=vmem, size = 0x800, scoped, tag = 'output window, operand 1']
    #allocation9 [shape = 's32[2]{0}', space=sflag, size = 0x8, scoped, tag = 'scoped memory for tpu_custom_call.1']
    %9 = vsyncpa [#allocation3], 0
    %10 = vsyncpa [#allocation6], 0
    %s11 = scalar_lea.sflag [#allocation6], 1
    %12 = vsyncpa %s11, 0
    %13 = vsyncpa [#allocation4], 0
    %s14 = scalar_lea.sflag [#allocation4], 1
    %15 = vsyncpa %s14, 0
    %16 = vsyncpa [#allocation9], 0
    %s17 = scalar_lea.sflag [#allocation9], 1
    %18 = vsyncpa %s17, 0
    loop: start=0, step=1, limit=4
    $region2: #{tpu_custom_call.1} parent=1 // loop_pre_header
      _
    $region3: #{tpu_custom_call.1} parent=1 // loop_header
      %s20 = sphi 0, %s24
      %p21 = scmp.ge.s32.totalorder %s20, 4
      %s28 = sphi 0, %s28
      %s30 = sphi 0, %s28
      %s31 = sphi 0, %s30
      %s45 = sphi 0, %s31
      %s51 = sphi 0, %s53
      %s54 = sphi 0, %s51
      %s55 = sphi 0, %s54
      %s71 = sphi 0, %s55
      %s77 = sphi 0, %s79
      %s80 = sphi 0, %s77
      %s81 = sphi 0, %s80
      %s97 = sphi 0, %s81
      %s103 = sphi 0, %s105
      %s106 = sphi 0, %s103
      %s107 = sphi 0, %s106
      %s123 = sphi 0, %s107
    $region4: #{tpu_custom_call.1} parent=1 // loop_header_branch
      %23 = sbr.rel (%p21) target = $region8
    $region5: #{tpu_custom_call.1} parent=1 // loop_body
      %s25 = ssub.s32 %s20, 1
      %s26 = ssub.s32 %s20, 2
      %s27 = sadd.s32 %s20, 1
      %s29 = sadd.s32 %s28, 1
      %p32 = scmp.eq.s32.totalorder %s20, 1
      %p33 = scmp.ne.s32.totalorder %s28, %s30
      %p34 = scmp.eq.s32.totalorder %s20, 0
      %p35 = por %p33, %p34
      %p36 = scmp.ne.s32.totalorder %s28, %s30
      %p37 = scmp.eq.s32.totalorder %s25, 1
      %p38 = por %p36, %p37
      %p39 = scmp.ne.s32.totalorder %s30, %s31
      %p40 = scmp.eq.s32.totalorder %s25, 0
      %p41 = por %p39, %p40
      %p42 = scmp.ne.s32.totalorder %s30, %s31
      %p43 = scmp.eq.s32.totalorder %s26, 1
      %p44 = por %p42, %p43
      %p46 = scmp.ne.s32.totalorder %s31, %s45
      %p47 = scmp.eq.s32.totalorder %s26, 0
      %p48 = por %p46, %p47
      %s49 = ssub.s32 %s20, %s27
      %p50 = scmp.eq.s32.totalorder %s49, 0
      %s52 = sadd.s32 %s51, 1
      %s53 = scalar_select %p50, %s51, %s52
      %p56 = pneg %p50
      %p57 = scmp.eq.s32.totalorder %s20, 1
      %p58 = por %p56, %p57
      %p59 = scmp.ne.s32.totalorder %s51, %s54
      %p60 = scmp.eq.s32.totalorder %s20, 0
      %p61 = por %p59, %p60
      %p62 = scmp.ne.s32.totalorder %s51, %s54
      %p63 = scmp.eq.s32.totalorder %s25, 1
      %p64 = por %p62, %p63
      %p65 = scmp.ne.s32.totalorder %s54, %s55
      %p66 = scmp.eq.s32.totalorder %s25, 0
      %p67 = por %p65, %p66
      %p68 = scmp.ne.s32.totalorder %s54, %s55
      %p69 = scmp.eq.s32.totalorder %s26, 1
      %p70 = por %p68, %p69
      %p72 = scmp.ne.s32.totalorder %s55, %s71
      %p73 = scmp.eq.s32.totalorder %s26, 0
      %p74 = por %p72, %p73
      %s75 = ssub.s32 %s20, %s27
      %p76 = scmp.eq.s32.totalorder %s75, 0
      %s78 = sadd.s32 %s77, 1
      %s79 = scalar_select %p76, %s77, %s78
      %p82 = pneg %p76
      %p83 = scmp.eq.s32.totalorder %s20, 1
      %p84 = por %p82, %p83
      %p85 = scmp.ne.s32.totalorder %s77, %s80
      %p86 = scmp.eq.s32.totalorder %s20, 0
      %p87 = por %p85, %p86
      %p88 = scmp.ne.s32.totalorder %s77, %s80
      %p89 = scmp.eq.s32.totalorder %s25, 1
      %p90 = por %p88, %p89
      %p91 = scmp.ne.s32.totalorder %s80, %s81
      %p92 = scmp.eq.s32.totalorder %s25, 0
      %p93 = por %p91, %p92
      %p94 = scmp.ne.s32.totalorder %s80, %s81
      %p95 = scmp.eq.s32.totalorder %s26, 1
      %p96 = por %p94, %p95
      %p98 = scmp.ne.s32.totalorder %s81, %s97
      %p99 = scmp.eq.s32.totalorder %s26, 0
      %p100 = por %p98, %p99
      %s101 = ssub.s32 %s20, %s27
      %p102 = scmp.eq.s32.totalorder %s101, 0
      %s104 = sadd.s32 %s103, 1
      %s105 = scalar_select %p102, %s103, %s104
      %p108 = pneg %p102
      %p109 = scmp.eq.s32.totalorder %s20, 1
      %p110 = por %p108, %p109
      %p111 = scmp.ne.s32.totalorder %s103, %s106
      %p112 = scmp.eq.s32.totalorder %s20, 0
      %p113 = por %p111, %p112
      %p114 = scmp.ne.s32.totalorder %s103, %s106
      %p115 = scmp.eq.s32.totalorder %s25, 1
      %p116 = por %p114, %p115
      %p117 = scmp.ne.s32.totalorder %s106, %s107
      %p118 = scmp.eq.s32.totalorder %s25, 0
      %p119 = por %p117, %p118
      %p120 = scmp.ne.s32.totalorder %s106, %s107
      %p121 = scmp.eq.s32.totalorder %s26, 1
      %p122 = por %p120, %p121
      %p124 = scmp.ne.s32.totalorder %s107, %s123
      %p125 = scmp.eq.s32.totalorder %s26, 0
      %p126 = por %p124, %p125
      %p127 = scmp.le.s32.totalorder 1, %s20
      %p128 = scmp.lt.s32.totalorder %s20, 3
      %p129 = pnand %p127, %p128
      %p130 = pneg %p129
      // Predicated region
      $region9: #{tpu_custom_call.1} parent=5 // pred_check
        _
      $region10: #{tpu_custom_call.1} parent=5 // pred_check_branch
        %132 = sbr.rel (%p129) target = $region12
      $region11: #{tpu_custom_call.1} parent=5 // pred_region
        %s133 = ssub.s32 %s20, 1
        // Predicated region
        $region13: #{tpu_custom_call.1} parent=11 // pred_check
          %p134 = pneg %p41
        $region14: #{tpu_custom_call.1} parent=11 // pred_check_branch
          %136 = sbr.rel (%p134) target = $region16
        $region15: #{tpu_custom_call.1} parent=11 // pred_region
          %138 = vsyncadd [#allocation3], 0
          %s139 = sshll.u32 %s0, 4
          %s140 = int_to_ptr.hbm [resolvable:$true] %s139
          %s141 = sshll.u32 [#allocation2], 4
          %s142 = int_to_ptr.vmem [resolvable:$true] %s141
          %147 = dma.hbm_to_vmem [thread:$0]  %s140, 16384, %s142, [#allocation3], 256, 256, 16
        $region16: #{tpu_custom_call.1} parent=11 // pred_fallthru
          _
      $region12: #{tpu_custom_call.1} parent=5 // pred_fallthru
        _
      %p148 = scmp.lt.s32.totalorder %s20, 2
      // Predicated region
      $region17: #{tpu_custom_call.1} parent=5 // pred_check
        %p149 = pneg %p148
      $region18: #{tpu_custom_call.1} parent=5 // pred_check_branch
        %151 = sbr.rel (%p149) target = $region20
      $region19: #{tpu_custom_call.1} parent=5 // pred_region
        // Predicated region
        $region21: #{tpu_custom_call.1} parent=19 // pred_check
          %p152 = pneg %p61
        $region22: #{tpu_custom_call.1} parent=19 // pred_check_branch
          %154 = sbr.rel (%p152) target = $region24
        $region23: #{tpu_custom_call.1} parent=19 // pred_region
          %s155 = sand.u32 %s51, 1
          %s156 = scalar_lea.sflag [#allocation6], %s155
          %s157 = sand.u32 %s51, 1
          %s158 = smul.addr %s157, 8
          %s159 = scalar_lea.vmem [#allocation5], %s158
          %161 = vsyncadd %s156, 0
          %s162 = smul.addr %s20, 2
          %s163 = smul.addr %s162, 4
          %s164 = scalar_lea.hbm %s1, %s163
          %s166 = sshll.u32 %s164, 4
          %s167 = int_to_ptr.hbm [resolvable:$true] %s166
          %s168 = sshll.u32 %s159, 4
          %s169 = int_to_ptr.vmem [resolvable:$true] %s168
          %171 = dma.hbm_to_vmem [thread:$0]  %s167, 128, %s169, %s156
        $region24: #{tpu_custom_call.1} parent=19 // pred_fallthru
          _
      $region20: #{tpu_custom_call.1} parent=5 // pred_fallthru
        _
      %p172 = scmp.le.s32.totalorder 1, %s20
      %p173 = scmp.lt.s32.totalorder %s20, 3
      %p174 = pnand %p172, %p173
      %p175 = pneg %p174
      // Predicated region
      $region25: #{tpu_custom_call.1} parent=5 // pred_check
        _
      $region26: #{tpu_custom_call.1} parent=5 // pred_check_branch
        %177 = sbr.rel (%p174) target = $region28
      $region27: #{tpu_custom_call.1} parent=5 // pred_region
        %s178 = ssub.s32 %s20, 1
        // Predicated region
        $region29: #{tpu_custom_call.1} parent=27 // pred_check
          %p179 = pneg %p41
        $region30: #{tpu_custom_call.1} parent=27 // pred_check_branch
          %181 = sbr.rel (%p179) target = $region32
        $region31: #{tpu_custom_call.1} parent=27 // pred_region
          %183 = dma.done [#allocation3], 16384
        $region32: #{tpu_custom_call.1} parent=27 // pred_fallthru
          _
        %s184 = sand.u32 %s54, 1
        %s185 = scalar_lea.sflag [#allocation6], %s184
        %s186 = sand.u32 %s54, 1
        %s187 = smul.addr %s186, 8
        %s188 = scalar_lea.vmem [#allocation5], %s187
        // Predicated region
        $region33: #{tpu_custom_call.1} parent=27 // pred_check
          %p189 = pneg %p67
        $region34: #{tpu_custom_call.1} parent=27 // pred_check_branch
          %191 = sbr.rel (%p189) target = $region36
        $region35: #{tpu_custom_call.1} parent=27 // pred_region
          %193 = dma.done %s185, 128
        $region36: #{tpu_custom_call.1} parent=27 // pred_fallthru
          _
        %p194 = pneg %p41
        %p195 = pneg %p38
        %s196 = sand.u32 %s54, 1
        %s197 = scalar_lea.sflag [#allocation6], %s196
        %s198 = sand.u32 %s54, 1
        %s199 = smul.addr %s198, 8
        %s200 = scalar_lea.vmem [#allocation5], %s199
        %p201 = pneg %p67
        %p202 = pneg %p64
        %p203 = pneg %p93
        %p204 = pneg %p90
        %s205 = sand.u32 %s80, 1
        %s206 = scalar_lea.sflag [#allocation4], %s205
        %s207 = sand.u32 %s80, 1
        %s208 = smul.addr %s207, 8
        %s209 = scalar_lea.vmem [#allocation7], %s208
        %p210 = pneg %p119
        %p211 = pneg %p116
        %s212 = sand.u32 %s106, 1
        %s213 = scalar_lea.sflag [#allocation9], %s212
        %s214 = sand.u32 %s106, 1
        %s215 = smul.addr %s214, 2
        %s216 = scalar_lea.vmem [#allocation8], %s215
        %v217 = vld [vmem:[%s188] sm:$0xff]
        %219 = vst [vmem:[#allocation1] ss:$2 sm:$0xff] %v217
        %v220 = vld.sshfl [vmem:[#allocation1] sm:$0xff pattern:$0x75316420]
        %v221 = vld.sshfl [vmem:[#allocation1 + $0x8] sm:$0xff pattern:$0x75316420]
        %vm224 = vcmask 1043456
        %v225 = vsel %vm224, %v220, -inf
        %v226 = vrot.slane %v225, 4
        %v227 = vmax.f32 %v225, %v226
        %v228 = vrot.slane %v227, 2
        %v229 = vmax.f32 %v227, %v228
        %v230 = vrot.slane %v229, 1
        %v231 = vmax.f32 %v229, %v230
        %v232 = vsel %vm224, %v221, -inf
        %v233 = vrot.slane %v232, 4
        %v234 = vmax.f32 %v232, %v233
        %v235 = vrot.slane %v234, 2
        %v236 = vmax.f32 %v234, %v235
        %v237 = vrot.slane %v236, 1
        %v238 = vmax.f32 %v236, %v237
        %239 = vst [vmem:[#allocation1] ss:$2 sm:$0xff] %v217
        %v240 = vld.sshfl [vmem:[#allocation1] sm:$0xff pattern:$0x75316420]
        %v241 = vld.sshfl [vmem:[#allocation1 + $0x8] sm:$0xff pattern:$0x75316420]
        %v244 = vsel %vm224, %v240, 0.0
        %v245 = vrot.slane %v244, 4
        %v246 = vadd.f32 %v244, %v245
        %v247 = vrot.slane %v246, 2
        %v248 = vadd.f32 %v246, %v247
        %v249 = vrot.slane %v248, 1
        %v250 = vadd.f32 %v248, %v249
        %v251 = vsel %vm224, %v241, 0.0
        %v252 = vrot.slane %v251, 4
        %v253 = vadd.f32 %v251, %v252
        %v254 = vrot.slane %v253, 2
        %v255 = vadd.f32 %v253, %v254
        %v256 = vrot.slane %v255, 1
        %v257 = vadd.f32 %v255, %v256
        %v258 = vrcp.pop 4.0
        %v259 = vmul.f32 4.0, %v258
        %v260 = vsub.f32 1.0, %v259
        %v261 = vmul.f32 %v258, %v260
        %v262 = vadd.f32 %v258, %v261
        %vm263 = vweird.f32 %v258
        %v264 = vsel %vm263, %v258, %v262
        %v265 = vmul.f32 %v250, %v264
        %v266 = vmul.f32 %v257, %v264
        %v267 = vld [vmem:[#allocation2] sm:$0xff]
        %v268 = vld [vmem:[#allocation2 + $0x8] sm:$0xff]
        %v269 = vld [vmem:[#allocation2 + $0x10] sm:$0xff]
        %v270 = vld [vmem:[#allocation2 + $0x18] sm:$0xff]
        %v271 = vld [vmem:[#allocation2 + $0x20] sm:$0xff]
        %v272 = vld [vmem:[#allocation2 + $0x28] sm:$0xff]
        %v273 = vld [vmem:[#allocation2 + $0x30] sm:$0xff]
        %v274 = vld [vmem:[#allocation2 + $0x38] sm:$0xff]
        %v275 = vld [vmem:[#allocation2 + $0x40] sm:$0xff]
        %v276 = vld [vmem:[#allocation2 + $0x48] sm:$0xff]
        %v277 = vld [vmem:[#allocation2 + $0x50] sm:$0xff]
        %v278 = vld [vmem:[#allocation2 + $0x58] sm:$0xff]
        %v279 = vld [vmem:[#allocation2 + $0x60] sm:$0xff]
        %v280 = vld [vmem:[#allocation2 + $0x68] sm:$0xff]
        %v281 = vld [vmem:[#allocation2 + $0x70] sm:$0xff]
        %v282 = vld [vmem:[#allocation2 + $0x78] sm:$0xff]
        %v283 = vld [vmem:[#allocation2 + $0x80] sm:$0xff]
        %v284 = vld [vmem:[#allocation2 + $0x88] sm:$0xff]
        %v285 = vld [vmem:[#allocation2 + $0x90] sm:$0xff]
        %v286 = vld [vmem:[#allocation2 + $0x98] sm:$0xff]
        %v287 = vld [vmem:[#allocation2 + $0xa0] sm:$0xff]
        %v288 = vld [vmem:[#allocation2 + $0xa8] sm:$0xff]
        %v289 = vld [vmem:[#allocation2 + $0xb0] sm:$0xff]
        %v290 = vld [vmem:[#allocation2 + $0xb8] sm:$0xff]
        %v291 = vld [vmem:[#allocation2 + $0xc0] sm:$0xff]
        %v292 = vld [vmem:[#allocation2 + $0xc8] sm:$0xff]
        %v293 = vld [vmem:[#allocation2 + $0xd0] sm:$0xff]
        %v294 = vld [vmem:[#allocation2 + $0xd8] sm:$0xff]
        %v295 = vld [vmem:[#allocation2 + $0xe0] sm:$0xff]
        %v296 = vld [vmem:[#allocation2 + $0xe8] sm:$0xff]
        %v297 = vld [vmem:[#allocation2 + $0xf0] sm:$0xff]
        %v298 = vld [vmem:[#allocation2 + $0xf8] sm:$0xff]
        %v299 = vld [vmem:[#allocation2 + $0x100] sm:$0xff]
        %v300 = vld [vmem:[#allocation2 + $0x108] sm:$0xff]
        %v301 = vld [vmem:[#allocation2 + $0x110] sm:$0xff]
        %v302 = vld [vmem:[#allocation2 + $0x118] sm:$0xff]
        %v303 = vld [vmem:[#allocation2 + $0x120] sm:$0xff]
        %v304 = vld [vmem:[#allocation2 + $0x128] sm:$0xff]
        %v305 = vld [vmem:[#allocation2 + $0x130] sm:$0xff]
        %v306 = vld [vmem:[#allocation2 + $0x138] sm:$0xff]
        %v307 = vld [vmem:[#allocation2 + $0x140] sm:$0xff]
        %v308 = vld [vmem:[#allocation2 + $0x148] sm:$0xff]
        %v309 = vld [vmem:[#allocation2 + $0x150] sm:$0xff]
        %v310 = vld [vmem:[#allocation2 + $0x158] sm:$0xff]
        %v311 = vld [vmem:[#allocation2 + $0x160] sm:$0xff]
        %v312 = vld [vmem:[#allocation2 + $0x168] sm:$0xff]
        %v313 = vld [vmem:[#allocation2 + $0x170] sm:$0xff]
        %v314 = vld [vmem:[#allocation2 + $0x178] sm:$0xff]
        %v315 = vld [vmem:[#allocation2 + $0x180] sm:$0xff]
        %v316 = vld [vmem:[#allocation2 + $0x188] sm:$0xff]
        %v317 = vld [vmem:[#allocation2 + $0x190] sm:$0xff]
        %v318 = vld [vmem:[#allocation2 + $0x198] sm:$0xff]
        %v319 = vld [vmem:[#allocation2 + $0x1a0] sm:$0xff]
        %v320 = vld [vmem:[#allocation2 + $0x1a8] sm:$0xff]
        %v321 = vld [vmem:[#allocation2 + $0x1b0] sm:$0xff]
        %v322 = vld [vmem:[#allocation2 + $0x1b8] sm:$0xff]
        %v323 = vld [vmem:[#allocation2 + $0x1c0] sm:$0xff]
        %v324 = vld [vmem:[#allocation2 + $0x1c8] sm:$0xff]
        %v325 = vld [vmem:[#allocation2 + $0x1d0] sm:$0xff]
        %v326 = vld [vmem:[#allocation2 + $0x1d8] sm:$0xff]
        %v327 = vld [vmem:[#allocation2 + $0x1e0] sm:$0xff]
        %v328 = vld [vmem:[#allocation2 + $0x1e8] sm:$0xff]
        %v329 = vld [vmem:[#allocation2 + $0x1f0] sm:$0xff]
        %v330 = vld [vmem:[#allocation2 + $0x1f8] sm:$0xff]
        %s331 = scalar_lea.vmem [#allocation2], 512
        %v332 = vld [vmem:[%s331] sm:$0xff]
        %v333 = vld [vmem:[%s331 + $0x8] sm:$0xff]
        %v334 = vld [vmem:[%s331 + $0x10] sm:$0xff]
        %v335 = vld [vmem:[%s331 + $0x18] sm:$0xff]
        %v336 = vld [vmem:[%s331 + $0x20] sm:$0xff]
        %v337 = vld [vmem:[%s331 + $0x28] sm:$0xff]
        %v338 = vld [vmem:[%s331 + $0x30] sm:$0xff]
        %v339 = vld [vmem:[%s331 + $0x38] sm:$0xff]
        %v340 = vld [vmem:[%s331 + $0x40] sm:$0xff]
        %v341 = vld [vmem:[%s331 + $0x48] sm:$0xff]
        %v342 = vld [vmem:[%s331 + $0x50] sm:$0xff]
        %v343 = vld [vmem:[%s331 + $0x58] sm:$0xff]
        %v344 = vld [vmem:[%s331 + $0x60] sm:$0xff]
        %v345 = vld [vmem:[%s331 + $0x68] sm:$0xff]
        %v346 = vld [vmem:[%s331 + $0x70] sm:$0xff]
        %v347 = vld [vmem:[%s331 + $0x78] sm:$0xff]
        %v348 = vld [vmem:[%s331 + $0x80] sm:$0xff]
        %v349 = vld [vmem:[%s331 + $0x88] sm:$0xff]
        %v350 = vld [vmem:[%s331 + $0x90] sm:$0xff]
        %v351 = vld [vmem:[%s331 + $0x98] sm:$0xff]
        %v352 = vld [vmem:[%s331 + $0xa0] sm:$0xff]
        %v353 = vld [vmem:[%s331 + $0xa8] sm:$0xff]
        %v354 = vld [vmem:[%s331 + $0xb0] sm:$0xff]
        %v355 = vld [vmem:[%s331 + $0xb8] sm:$0xff]
        %v356 = vld [vmem:[%s331 + $0xc0] sm:$0xff]
        %v357 = vld [vmem:[%s331 + $0xc8] sm:$0xff]
        %v358 = vld [vmem:[%s331 + $0xd0] sm:$0xff]
        %v359 = vld [vmem:[%s331 + $0xd8] sm:$0xff]
        %v360 = vld [vmem:[%s331 + $0xe0] sm:$0xff]
        %v361 = vld [vmem:[%s331 + $0xe8] sm:$0xff]
        %v362 = vld [vmem:[%s331 + $0xf0] sm:$0xff]
        %v363 = vld [vmem:[%s331 + $0xf8] sm:$0xff]
        %v364 = vld [vmem:[%s331 + $0x100] sm:$0xff]
        %v365 = vld [vmem:[%s331 + $0x108] sm:$0xff]
        %v366 = vld [vmem:[%s331 + $0x110] sm:$0xff]
        %v367 = vld [vmem:[%s331 + $0x118] sm:$0xff]
        %v368 = vld [vmem:[%s331 + $0x120] sm:$0xff]
        %v369 = vld [vmem:[%s331 + $0x128] sm:$0xff]
        %v370 = vld [vmem:[%s331 + $0x130] sm:$0xff]
        %v371 = vld [vmem:[%s331 + $0x138] sm:$0xff]
        %v372 = vld [vmem:[%s331 + $0x140] sm:$0xff]
        %v373 = vld [vmem:[%s331 + $0x148] sm:$0xff]
        %v374 = vld [vmem:[%s331 + $0x150] sm:$0xff]
        %v375 = vld [vmem:[%s331 + $0x158] sm:$0xff]
        %v376 = vld [vmem:[%s331 + $0x160] sm:$0xff]
        %v377 = vld [vmem:[%s331 + $0x168] sm:$0xff]
        %v378 = vld [vmem:[%s331 + $0x170] sm:$0xff]
        %v379 = vld [vmem:[%s331 + $0x178] sm:$0xff]
        %v380 = vld [vmem:[%s331 + $0x180] sm:$0xff]
        %v381 = vld [vmem:[%s331 + $0x188] sm:$0xff]
        %v382 = vld [vmem:[%s331 + $0x190] sm:$0xff]
        %v383 = vld [vmem:[%s331 + $0x198] sm:$0xff]
        %v384 = vld [vmem:[%s331 + $0x1a0] sm:$0xff]
        %v385 = vld [vmem:[%s331 + $0x1a8] sm:$0xff]
        %v386 = vld [vmem:[%s331 + $0x1b0] sm:$0xff]
        %v387 = vld [vmem:[%s331 + $0x1b8] sm:$0xff]
        %v388 = vld [vmem:[%s331 + $0x1c0] sm:$0xff]
        %v389 = vld [vmem:[%s331 + $0x1c8] sm:$0xff]
        %v390 = vld [vmem:[%s331 + $0x1d0] sm:$0xff]
        %v391 = vld [vmem:[%s331 + $0x1d8] sm:$0xff]
        %v392 = vld [vmem:[%s331 + $0x1e0] sm:$0xff]
        %v393 = vld [vmem:[%s331 + $0x1e8] sm:$0xff]
        %v394 = vld [vmem:[%s331 + $0x1f0] sm:$0xff]
        %v395 = vld [vmem:[%s331 + $0x1f8] sm:$0xff]
        %396 = vmatpush.msra.mxu0 %v362
        %397 = vmatpush.msra.mxu0 %v360
        %398 = vmatpush.msra.mxu0 %v358
        %399 = vmatpush.msra.mxu0 %v356
        %400 = vmatpush.msra.mxu0 %v354
        %401 = vmatpush.msra.mxu0 %v352
        %402 = vmatpush.msra.mxu0 %v350
        %403 = vmatpush.msra.mxu0 %v348
        %404 = vmatpush.msra.mxu0 %v346
        %405 = vmatpush.msra.mxu0 %v344
        %406 = vmatpush.msra.mxu0 %v342
        %407 = vmatpush.msra.mxu0 %v340
        %408 = vmatpush.msra.mxu0 %v338
        %409 = vmatpush.msra.mxu0 %v336
        %410 = vmatpush.msra.mxu0 %v334
        %411 = vmatpush.msra.mxu0 %v332
        %412 = vmatmul.f32.gmra.mxu0 %v265
        %v413 = vpop.f32.mrf.mxu0
        %v414 = vadd.f32 0.0, %v413
        %415 = vdwg.mxu0
        %416 = vmatpush.msra.mxu0 %v394
        %417 = vmatpush.msra.mxu0 %v392
        %418 = vmatpush.msra.mxu0 %v390
        %419 = vmatpush.msra.mxu0 %v388
        %420 = vmatpush.msra.mxu0 %v386
        %421 = vmatpush.msra.mxu0 %v384
        %422 = vmatpush.msra.mxu0 %v382
        %423 = vmatpush.msra.mxu0 %v380
        %424 = vmatpush.msra.mxu0 %v378
        %425 = vmatpush.msra.mxu0 %v376
        %426 = vmatpush.msra.mxu0 %v374
        %427 = vmatpush.msra.mxu0 %v372
        %428 = vmatpush.msra.mxu0 %v370
        %429 = vmatpush.msra.mxu0 %v368
        %430 = vmatpush.msra.mxu0 %v366
        %431 = vmatpush.msra.mxu0 %v364
        %432 = vmatmul.f32.gmra.mxu0 %v266
        %v433 = vpop.f32.mrf.mxu0
        %v434 = vadd.f32 %v414, %v433
        %435 = vdwg.mxu0
        %436 = vmatpush.msra.mxu0 %v363
        %437 = vmatpush.msra.mxu0 %v361
        %438 = vmatpush.msra.mxu0 %v359
        %439 = vmatpush.msra.mxu0 %v357
        %440 = vmatpush.msra.mxu0 %v355
        %441 = vmatpush.msra.mxu0 %v353
        %442 = vmatpush.msra.mxu0 %v351
        %443 = vmatpush.msra.mxu0 %v349
        %444 = vmatpush.msra.mxu0 %v347
        %445 = vmatpush.msra.mxu0 %v345
        %446 = vmatpush.msra.mxu0 %v343
        %447 = vmatpush.msra.mxu0 %v341
        %448 = vmatpush.msra.mxu0 %v339
        %449 = vmatpush.msra.mxu0 %v337
        %450 = vmatpush.msra.mxu0 %v335
        %451 = vmatpush.msra.mxu0 %v333
        %452 = vmatmul.f32.gmra.mxu0 %v265
        %v453 = vpop.f32.mrf.mxu0
        %v454 = vadd.f32 0.0, %v453
        %455 = vdwg.mxu0
        %456 = vmatpush.msra.mxu0 %v395
        %457 = vmatpush.msra.mxu0 %v393
        %458 = vmatpush.msra.mxu0 %v391
        %459 = vmatpush.msra.mxu0 %v389
        %460 = vmatpush.msra.mxu0 %v387
        %461 = vmatpush.msra.mxu0 %v385
        %462 = vmatpush.msra.mxu0 %v383
        %463 = vmatpush.msra.mxu0 %v381
        %464 = vmatpush.msra.mxu0 %v379
        %465 = vmatpush.msra.mxu0 %v377
        %466 = vmatpush.msra.mxu0 %v375
        %467 = vmatpush.msra.mxu0 %v373
        %468 = vmatpush.msra.mxu0 %v371
        %469 = vmatpush.msra.mxu0 %v369
        %470 = vmatpush.msra.mxu0 %v367
        %471 = vmatpush.msra.mxu0 %v365
        %472 = vmatmul.f32.gmra.mxu0 %v266
        %v473 = vpop.f32.mrf.mxu0
        %v474 = vadd.f32 %v454, %v473
        %475 = vdwg.mxu0
        %476 = vmatpush.msra.mxu0 %v297
        %477 = vmatpush.msra.mxu0 %v295
        %478 = vmatpush.msra.mxu0 %v293
        %479 = vmatpush.msra.mxu0 %v291
        %480 = vmatpush.msra.mxu0 %v289
        %481 = vmatpush.msra.mxu0 %v287
        %482 = vmatpush.msra.mxu0 %v285
        %483 = vmatpush.msra.mxu0 %v283
        %484 = vmatpush.msra.mxu0 %v281
        %485 = vmatpush.msra.mxu0 %v279
        %486 = vmatpush.msra.mxu0 %v277
        %487 = vmatpush.msra.mxu0 %v275
        %488 = vmatpush.msra.mxu0 %v273
        %489 = vmatpush.msra.mxu0 %v271
        %490 = vmatpush.msra.mxu0 %v269
        %491 = vmatpush.msra.mxu0 %v267
        %492 = vmatmul.f32.gmra.mxu0 %v231
        %v493 = vpop.f32.mrf.mxu0
        %v494 = vadd.f32 %v434, %v493
        %495 = vdwg.mxu0
        %496 = vmatpush.msra.mxu0 %v329
        %497 = vmatpush.msra.mxu0 %v327
        %498 = vmatpush.msra.mxu0 %v325
        %499 = vmatpush.msra.mxu0 %v323
        %500 = vmatpush.msra.mxu0 %v321
        %501 = vmatpush.msra.mxu0 %v319
        %502 = vmatpush.msra.mxu0 %v317
        %503 = vmatpush.msra.mxu0 %v315
        %504 = vmatpush.msra.mxu0 %v313
        %505 = vmatpush.msra.mxu0 %v311
        %506 = vmatpush.msra.mxu0 %v309
        %507 = vmatpush.msra.mxu0 %v307
        %508 = vmatpush.msra.mxu0 %v305
        %509 = vmatpush.msra.mxu0 %v303
        %510 = vmatpush.msra.mxu0 %v301
        %511 = vmatpush.msra.mxu0 %v299
        %512 = vmatmul.f32.gmra.mxu0 %v238
        %v513 = vpop.f32.mrf.mxu0
        %v514 = vadd.f32 %v494, %v513
        %515 = vdwg.mxu0
        %516 = vmatpush.msra.mxu0 %v298
        %517 = vmatpush.msra.mxu0 %v296
        %518 = vmatpush.msra.mxu0 %v294
        %519 = vmatpush.msra.mxu0 %v292
        %520 = vmatpush.msra.mxu0 %v290
        %521 = vmatpush.msra.mxu0 %v288
        %522 = vmatpush.msra.mxu0 %v286
        %523 = vmatpush.msra.mxu0 %v284
        %524 = vmatpush.msra.mxu0 %v282
        %525 = vmatpush.msra.mxu0 %v280
        %526 = vmatpush.msra.mxu0 %v278
        %527 = vmatpush.msra.mxu0 %v276
        %528 = vmatpush.msra.mxu0 %v274
        %529 = vmatpush.msra.mxu0 %v272
        %530 = vmatpush.msra.mxu0 %v270
        %531 = vmatpush.msra.mxu0 %v268
        %532 = vmatmul.f32.gmra.mxu0 %v231
        %v533 = vpop.f32.mrf.mxu0
        %v534 = vadd.f32 %v474, %v533
        %535 = vdwg.mxu0
        %536 = vmatpush.msra.mxu0 %v330
        %537 = vmatpush.msra.mxu0 %v328
        %538 = vmatpush.msra.mxu0 %v326
        %539 = vmatpush.msra.mxu0 %v324
        %540 = vmatpush.msra.mxu0 %v322
        %541 = vmatpush.msra.mxu0 %v320
        %542 = vmatpush.msra.mxu0 %v318
        %543 = vmatpush.msra.mxu0 %v316
        %544 = vmatpush.msra.mxu0 %v314
        %545 = vmatpush.msra.mxu0 %v312
        %546 = vmatpush.msra.mxu0 %v310
        %547 = vmatpush.msra.mxu0 %v308
        %548 = vmatpush.msra.mxu0 %v306
        %549 = vmatpush.msra.mxu0 %v304
        %550 = vmatpush.msra.mxu0 %v302
        %551 = vmatpush.msra.mxu0 %v300
        %552 = vmatmul.f32.gmra.mxu0 %v238
        %v553 = vpop.f32.mrf.mxu0
        %v554 = vadd.f32 %v534, %v553
        %555 = vdwg.mxu0
        %v556 = vxor.u32 %v514, 2147483648
        %v557 = vxor.u32 %v554, 2147483648
        %v558 = vmul.f32 %v556, 1.442695
        %v559 = vpow.pop %v558
        %v560 = vmul.f32 %v557, 1.442695
        %v561 = vpow.pop %v560
        %v562 = vadd.f32 %v559, 1.0
        %v563 = vadd.f32 %v561, 1.0
        %v564 = vrcp.pop %v562
        %v565 = vmul.f32 %v562, %v564
        %v566 = vsub.f32 1.0, %v565
        %v567 = vmul.f32 %v564, %v566
        %v568 = vadd.f32 %v564, %v567
        %vm569 = vweird.f32 %v562
        %vm570 = vweird.f32 %v564
        %vm571 = vmor %vm569, %vm570
        %v572 = vsel %vm571, %v564, %v568
        %v573 = vand.u32 2147483647, %v562
        %vm574 = vcmp.eq.f32.partialorder %v573, 8.507059e+37
        %v575 = vand.u32 %v562, 2147483648
        %v576 = vor.u32 1.1754944e-38, %v575
        %v577 = vsel %vm574, %v576, %v572
        %v578 = vmul.f32 1.0, %v577
        %v579 = vrcp.pop %v563
        %v580 = vmul.f32 %v563, %v579
        %v581 = vsub.f32 1.0, %v580
        %v582 = vmul.f32 %v579, %v581
        %v583 = vadd.f32 %v579, %v582
        %vm584 = vweird.f32 %v563
        %vm585 = vweird.f32 %v579
        %vm586 = vmor %vm584, %vm585
        %v587 = vsel %vm586, %v579, %v583
        %v588 = vand.u32 2147483647, %v563
        %vm589 = vcmp.eq.f32.partialorder %v588, 8.507059e+37
        %v590 = vand.u32 %v563, 2147483648
        %v591 = vor.u32 1.1754944e-38, %v590
        %v592 = vsel %vm589, %v591, %v587
        %v593 = vmul.f32 1.0, %v592
        %v596 = vrot.slane %v593, 7
        %vm597 = vcmask 1040384
        %v598 = vsel %vm597, %v578, %v596
        %v600 = vlaneseq
        %vm601 = vcmp.ge.s32.totalorder %v600, 0
        %vm602 = vcmp.lt.s32.totalorder %v600, 256
        %vm603 = vmand %vm601, %vm602
        %604 = vst.msk [vmem:[%s216] sm:$0x3] %vm603, %v598
        %v605 = vperm.slane %v578, 0
        %v606 = vperm.slane %v593, 0
        %v609 = vrot.slane %v606, 4
        %v610 = vsel %vm224, %v605, %v609
        %v612 = vmul.f32 %v217, %v610
        %613 = vst [vmem:[%s209] sm:$0xff] %v612
        %s614 = sand.u32 %s80, 1
        %s615 = scalar_lea.sflag [#allocation4], %s614
        %s616 = sand.u32 %s80, 1
        %s617 = smul.addr %s616, 8
        %s618 = scalar_lea.vmem [#allocation7], %s617
        %s619 = sand.u32 %s106, 1
        %s620 = scalar_lea.sflag [#allocation9], %s619
        %s621 = sand.u32 %s106, 1
        %s622 = smul.addr %s621, 2
        %s623 = scalar_lea.vmem [#allocation8], %s622
        // Predicated region
        $region37: #{tpu_custom_call.1} parent=27 // pred_check
          %p624 = pneg %p90
        $region38: #{tpu_custom_call.1} parent=27 // pred_check_branch
          %626 = sbr.rel (%p624) target = $region40
        $region39: #{tpu_custom_call.1} parent=27 // pred_region
          %628 = vsyncadd %s615, 0
          %s629 = smul.addr %s25, 2
          %s630 = smul.addr %s629, 4
          %s631 = scalar_lea.hbm %s2, %s630
          %s633 = sshll.u32 %s618, 4
          %s634 = int_to_ptr.vmem [resolvable:$true] %s633
          %s635 = sshll.u32 %s631, 4
          %s636 = int_to_ptr.hbm [resolvable:$true] %s635
          %638 = dma.vmem_to_hbm [thread:$0]  %s634, 128, %s636, %s615
        $region40: #{tpu_custom_call.1} parent=27 // pred_fallthru
          _
        // Predicated region
        $region41: #{tpu_custom_call.1} parent=27 // pred_check
          %p639 = pneg %p116
        $region42: #{tpu_custom_call.1} parent=27 // pred_check_branch
          %641 = sbr.rel (%p639) target = $region44
        $region43: #{tpu_custom_call.1} parent=27 // pred_region
          %643 = vsyncadd %s620, 0
          %s644 = smul.addr %s25, 2
          %s645 = scalar_lea.hbm %s3, %s644
          %s647 = sshll.u32 %s623, 4
          %s648 = int_to_ptr.vmem [resolvable:$true] %s647
          %s649 = sshll.u32 %s645, 4
          %s650 = int_to_ptr.hbm [resolvable:$true] %s649
          %652 = dma.vmem_to_hbm [thread:$0]  %s648, 32, %s650, %s620
        $region44: #{tpu_custom_call.1} parent=27 // pred_fallthru
          _
      $region28: #{tpu_custom_call.1} parent=5 // pred_fallthru
        _
      %p653 = scmp.le.s32.totalorder 2, %s20
      // Predicated region
      $region45: #{tpu_custom_call.1} parent=5 // pred_check
        %p654 = pneg %p653
      $region46: #{tpu_custom_call.1} parent=5 // pred_check_branch
        %656 = sbr.rel (%p654) target = $region48
      $region47: #{tpu_custom_call.1} parent=5 // pred_region
        %s657 = ssub.s32 %s20, 2
        // Predicated region
        $region49: #{tpu_custom_call.1} parent=47 // pred_check
          %p658 = pneg %p96
        $region50: #{tpu_custom_call.1} parent=47 // pred_check_branch
          %660 = sbr.rel (%p658) target = $region52
        $region51: #{tpu_custom_call.1} parent=47 // pred_region
          %s661 = sand.u32 %s81, 1
          %s662 = scalar_lea.sflag [#allocation4], %s661
          %s663 = sand.u32 %s81, 1
          %s664 = smul.addr %s663, 8
          %s665 = scalar_lea.vmem [#allocation7], %s664
          %667 = dma.done %s662, 128
        $region52: #{tpu_custom_call.1} parent=47 // pred_fallthru
          _
        // Predicated region
        $region53: #{tpu_custom_call.1} parent=47 // pred_check
          %p668 = pneg %p122
        $region54: #{tpu_custom_call.1} parent=47 // pred_check_branch
          %670 = sbr.rel (%p668) target = $region56
        $region55: #{tpu_custom_call.1} parent=47 // pred_region
          %s671 = sand.u32 %s107, 1
          %s672 = scalar_lea.sflag [#allocation9], %s671
          %s673 = sand.u32 %s107, 1
          %s674 = smul.addr %s673, 2
          %s675 = scalar_lea.vmem [#allocation8], %s674
          %677 = dma.done %s672, 32
        $region56: #{tpu_custom_call.1} parent=47 // pred_fallthru
          _
      $region48: #{tpu_custom_call.1} parent=5 // pred_fallthru
        _
    $region6: #{tpu_custom_call.1} parent=1 // loop_footer
      %s24 = sadd.s32 1, %s20
    $region7: #{tpu_custom_call.1} parent=1 // loop_footer_branch
      %19 = sbr.rel target = $region3
    $region8: #{tpu_custom_call.1} parent=1 // loop_exit
      _
    %678 = vsyncpa [#allocation3], 1
    %s679 = scalar_lea.sflag [#allocation3], 1
    %680 = vsyncpa %s679, 1
    %681 = vsyncpa [#allocation6], 1
    %s682 = scalar_lea.sflag [#allocation6], 1
    %683 = vsyncpa %s682, 1
    %684 = vsyncpa [#allocation4], 1
    %s685 = scalar_lea.sflag [#allocation4], 1
    %686 = vsyncpa %s685, 1
    %687 = vsyncpa [#allocation9], 1
    %s688 = scalar_lea.sflag [#allocation9], 1
    %689 = vsyncpa %s688, 1

</llo_original>
